<compile_context>
chip_gen: v5e
topology: v5e:2x2
jax: 0.10.0
libtpu: 0.0.40
codegen_flags: <defaults>
</compile_context>

<pallas_src>
import functools

import jax
import jax.numpy as jnp
from jax.experimental import pallas as pl
from jax.experimental.pallas import tpu as pltpu


def _fm_kernel(x1_ref, x0_ref, eps_ref, t_ref,
               wte_ref, bte_ref, wv_ref, bv_ref,
               part_ref, *, sigma):
    x1 = x1_ref[...].astype(jnp.float32)     # (TM, D)
    x0 = x0_ref[...].astype(jnp.float32)     # (TM, D)
    eps = eps_ref[...].astype(jnp.float32)   # (TM, D)
    t = t_ref[...].astype(jnp.float32)       # (TM, 1)

    # icfm path sample, reusing u_t = x1 - x0 for the interpolation:
    #   x = (1-t)*x0 + t*x1 + sigma*eps = x0 + t*u_t + sigma*eps
    u_t = x1 - x0
    x = x0 + t * u_t + sigma * eps

    # time_embedding: tanh(Linear(1->D)(t)) == tanh(t * w_te_row + b_te)
    # (rank-1 broadcast on the VPU/EUP; no matmul needed)
    t_embd = jnp.tanh(t * wte_ref[...].astype(jnp.float32)
                      + bte_ref[...].astype(jnp.float32))

    # vnet: Linear(D->D) on (x + t_embd); native bf16 MXU matmul, f32 accumulation.
    h = (x + t_embd).astype(wv_ref.dtype)
    v = jnp.dot(h, wv_ref[...], preferred_element_type=jnp.float32)
    v = v + bv_ref[...].astype(jnp.float32)

    # Recompute u_t from the (still-resident) VMEM tiles rather than keeping a
    # (TM, D) f32 temporary live across the MXU op (spare vld slots are cheaper
    # than vreg spills, especially on v5e with a single vst slot).
    u_t_post = x1_ref[...].astype(jnp.float32) - x0_ref[...].astype(jnp.float32)
    diff = v - u_t_post
    sq = diff * diff

    # Vreg-aligned partial reduction: (TM, D) -> (TM//8, 8, D) -> sum axis=0 -> (8, D).
    # Pure strided vadds (no cross-sublane XLU reduce) and an unmasked (8,128) store.
    tm, d = sq.shape
    part_ref[...] = jnp.sum(sq.reshape(tm // 8, 8, d), axis=0)


def _choose_tm(B, D, data_itemsize, wv_itemsize, budget_bytes):
    """Largest batch tile (multiple of 8, divisor of B, <=512) fitting the VMEM budget,
    preferring >=2 grid steps so the parallel axis can shard across v7x's two TCs."""
    cands = [t for t in range(8, min(B, 1024) + 1, 8) if B % t == 0]
    if not cands:
        raise ValueError(f"batch {B} must be a multiple of 8")

    def footprint(tm):
        return (2 * 3 * tm * D * data_itemsize          # x1/x0/eps tiles, double-buffered
                + 2 * tm * 4                            # t tile, double-buffered
                + 2 * (D * D * wv_itemsize + 3 * D * 4)  # resident params (2 bufs each)
                + 2 * 8 * D * 4)                        # (8, D) f32 partial output

    fitting = [t for t in cands if footprint(t) <= budget_bytes] or cands[:1]
    multi = [t for t in fitting if B // t >= 2]
    pool = multi if multi else fitting
    preferred = [t for t in pool if t <= 512]
    return max(preferred) if preferred else min(pool)


def flow_matching_loss(x1, x0, eps, t, w_te, b_te, w_v, b_v, *, sigma,
                       tm=None, vmem_limit_bytes=48 * 1024 * 1024):
    """Scalar forward loss of FlowMatching (prob_path='icfm', reduction='mean')."""
    B, D = x1.shape
    assert B % 8 == 0, f"batch {B} must be a multiple of 8 (pad if not)"
    assert D % 128 == 0, f"feature dim {D} must be a multiple of 128 (pad if not)"
    assert D <= 2048, "TODO(synk): tile w_v over N/K grid axes for D > 2048"

    if tm is None:
        tm = _choose_tm(B, D, x1.dtype.itemsize, w_v.dtype.itemsize,
                        budget_bytes=40 * 1024 * 1024)
    assert tm % 8 == 0 and B % tm == 0, (B, tm)
    n_tiles = B // tm

    kernel = functools.partial(_fm_kernel, sigma=float(sigma))

    data_spec = pl.BlockSpec((tm, D), lambda i: (i, 0))      # per-tile batch data
    t_spec = pl.BlockSpec((tm, 1), lambda i: (i, 0))         # per-tile times
    row_spec = pl.BlockSpec((1, D), lambda i: (0, 0))        # resident (1, D) params
    wv_spec = pl.BlockSpec((D, D), lambda i: (0, 0))         # resident (D, D) weight

    bytes_accessed = (3 * B * D * x1.dtype.itemsize          # x1, x0, eps
                      + B * t.dtype.itemsize                 # t
                      + D * D * w_v.dtype.itemsize           # w_v
                      + 3 * D * 4                            # w_te, b_te, b_v
                      + n_tiles * 8 * D * 4)                 # partial sums out
    cost = pl.CostEstimate(flops=2 * B * D * D,
                           transcendentals=B * D,            # tanh
                           bytes_accessed=bytes_accessed)

    partials = pl.pallas_call(
        kernel,
        out_shape=jax.ShapeDtypeStruct((n_tiles * 8, D), jnp.float32),
        grid_spec=pltpu.PrefetchScalarGridSpec(
            num_scalar_prefetch=0,
            grid=(n_tiles,),
            in_specs=[data_spec,   # x1
                      data_spec,   # x0
                      data_spec,   # eps
                      t_spec,      # t
                      row_spec,    # w_te
                      row_spec,    # b_te
                      wv_spec,     # w_v
                      row_spec],   # b_v
            out_specs=pl.BlockSpec((8, D), lambda i: (i, 0)),
        ),
        compiler_params=pltpu.CompilerParams(
            dimension_semantics=("parallel",),   # batch tiles are independent
            vmem_limit_bytes=vmem_limit_bytes,
        ),
        cost_estimate=cost,
    )(x1, x0, eps, t, w_te, b_te, w_v, b_v)

    # sum(diff^2) / (B*D) == mean over batch of mean over features.
    return jnp.sum(partials) * (1.0 / (B * D))


def _reference_loss(x1, x0, eps, t, w_te, b_te, w_v, b_v, sigma):
    # Pure-JAX reference with the same rounding points as the kernel
    # (bf16 inputs upcast to f32 for elementwise math; matmul inputs in w_v.dtype).
    x1 = x1.astype(jnp.float32)
    x0 = x0.astype(jnp.float32)
    eps = eps.astype(jnp.float32)
    t = t.astype(jnp.float32)
    mu_t = (1.0 - t) * x0 + t * x1
    x = mu_t + sigma * eps
    t_embd = jnp.tanh(t * w_te.astype(jnp.float32) + b_te.astype(jnp.float32))
    h = (x + t_embd).astype(w_v.dtype).astype(jnp.float32)
    v = h @ w_v.astype(jnp.float32) + b_v.astype(jnp.float32)
    u_t = x1 - x0
    return jnp.mean(jnp.mean((v - u_t) ** 2, axis=-1))


if __name__ == "__main__":
    # Small but lane/sublane-aligned shapes: B = 256 rows, D = 128 features.
    B, D = 256, 128
    sigma = 0.1

    key = jax.random.PRNGKey(0)
    k_x1, k_x0, k_eps, k_t, k_wte, k_bte, k_wv, k_bv = jax.random.split(key, 8)

    # Data; the randomness the torch module draws internally (x_0, path noise, t)
    # is materialized here deterministically and fed to the kernel.
    # x1/x0/eps travel as bf16 (halves HBM traffic); t stays f32 (tiny).
    x1 = jax.random.normal(k_x1, (B, D), dtype=jnp.float32).astype(jnp.bfloat16)
    x0 = jax.random.normal(k_x0, (B, D), dtype=jnp.float32).astype(jnp.bfloat16)
    eps = jax.random.normal(k_eps, (B, D), dtype=jnp.float32).astype(jnp.bfloat16)
    t = jax.random.uniform(k_t, (B, 1), dtype=jnp.float32)

    # Parameters, PyTorch-Linear-style uniform(-1/sqrt(fan_in), 1/sqrt(fan_in)).
    bound_te = 1.0  # fan_in = 1
    w_te = jax.random.uniform(k_wte, (1, D), minval=-bound_te, maxval=bound_te,
                              dtype=jnp.float32)
    b_te = jax.random.uniform(k_bte, (1, D), minval=-bound_te, maxval=bound_te,
                              dtype=jnp.float32)
    bound_v = 1.0 / float(jnp.sqrt(jnp.float32(D)))
    # Stored already transposed; bf16 so the MXU sees a native bf16 matmul.
    w_v = jax.random.uniform(k_wv, (D, D), minval=-bound_v, maxval=bound_v,
                             dtype=jnp.float32).astype(jnp.bfloat16)
    b_v = jax.random.uniform(k_bv, (1, D), minval=-bound_v, maxval=bound_v,
                             dtype=jnp.float32)

    loss = flow_matching_loss(x1, x0, eps, t, w_te, b_te, w_v, b_v, sigma=sigma)
    loss = jax.block_until_ready(loss)

    ref = _reference_loss(x1, x0, eps, t, w_te, b_te, w_v, b_v, sigma)
    assert jnp.allclose(loss, ref, rtol=2e-2, atol=2e-2), (loss, ref)

    print("KERNEL_OK")
</pallas_src>

<mosaic_0001>
module attributes {stable_mosaic.version = 11 : i64} {
  func.func @_fm_kernel(%arg0: i32, %arg1: memref<128x128xbf16, #tpu.memory_space<vmem>>, %arg2: memref<128x128xbf16, #tpu.memory_space<vmem>>, %arg3: memref<128x128xbf16, #tpu.memory_space<vmem>>, %arg4: memref<128x1xf32, #tpu.memory_space<vmem>>, %arg5: memref<1x128xf32, #tpu.memory_space<vmem>>, %arg6: memref<1x128xf32, #tpu.memory_space<vmem>>, %arg7: memref<128x128xbf16, #tpu.memory_space<vmem>>, %arg8: memref<1x128xf32, #tpu.memory_space<vmem>>, %arg9: memref<8x128xf32, #tpu.memory_space<vmem>>) attributes {dimension_semantics = [#tpu.dimension_semantics<parallel>], iteration_bounds = array<i64: 2>, scalar_prefetch = 0 : i64, scratch_operands = 0 : i64, tpu.core_type = #tpu.core_type<tc>, window_params = [{transform_indices = @transform_0, window_bounds = array<i64: 128, 128>}, {transform_indices = @transform_1, window_bounds = array<i64: 128, 128>}, {transform_indices = @transform_2, window_bounds = array<i64: 128, 128>}, {transform_indices = @transform_3, window_bounds = array<i64: 128, 1>}, {pipeline_mode = #tpu.pipeline_mode<synchronous>, transform_indices = @transform_4, window_bounds = array<i64: 1, 128>}, {pipeline_mode = #tpu.pipeline_mode<synchronous>, transform_indices = @transform_5, window_bounds = array<i64: 1, 128>}, {pipeline_mode = #tpu.pipeline_mode<synchronous>, transform_indices = @transform_6, window_bounds = array<i64: 128, 128>}, {pipeline_mode = #tpu.pipeline_mode<synchronous>, transform_indices = @transform_7, window_bounds = array<i64: 1, 128>}, {transform_indices = @transform_8, window_bounds = array<i64: 8, 128>}]} {
    %c0 = arith.constant 0 : index
    %c0_0 = arith.constant 0 : index
    %0 = vector.load %arg1[%c0, %c0_0] : memref<128x128xbf16, #tpu.memory_space<vmem>>, vector<128x128xbf16>
    %1 = arith.extf %0 : vector<128x128xbf16> to vector<128x128xf32>
    %c0_1 = arith.constant 0 : index
    %c0_2 = arith.constant 0 : index
    %2 = vector.load %arg2[%c0_1, %c0_2] : memref<128x128xbf16, #tpu.memory_space<vmem>>, vector<128x128xbf16>
    %3 = arith.extf %2 : vector<128x128xbf16> to vector<128x128xf32>
    %c0_3 = arith.constant 0 : index
    %c0_4 = arith.constant 0 : index
    %4 = vector.load %arg3[%c0_3, %c0_4] : memref<128x128xbf16, #tpu.memory_space<vmem>>, vector<128x128xbf16>
    %5 = arith.extf %4 : vector<128x128xbf16> to vector<128x128xf32>
    %c0_5 = arith.constant 0 : index
    %c0_6 = arith.constant 0 : index
    %6 = vector.load %arg4[%c0_5, %c0_6] : memref<128x1xf32, #tpu.memory_space<vmem>>, vector<128x1xf32>
    %7 = arith.subf %1, %3 : vector<128x128xf32>
    %8 = vector.broadcast %6 : vector<128x1xf32> to vector<128x128xf32>
    %9 = arith.mulf %8, %7 : vector<128x128xf32>
    %10 = arith.addf %3, %9 : vector<128x128xf32>
    %cst = arith.constant 1.000000e-01 : f32
    %11 = vector.broadcast %cst : f32 to vector<128x128xf32>
    %12 = arith.mulf %11, %5 : vector<128x128xf32>
    %13 = arith.addf %10, %12 : vector<128x128xf32>
    %c0_7 = arith.constant 0 : index
    %c0_8 = arith.constant 0 : index
    %14 = vector.load %arg5[%c0_7, %c0_8] : memref<1x128xf32, #tpu.memory_space<vmem>>, vector<1x128xf32>
    %15 = vector.broadcast %6 : vector<128x1xf32> to vector<128x128xf32>
    %16 = vector.broadcast %14 : vector<1x128xf32> to vector<128x128xf32>
    %17 = arith.mulf %15, %16 : vector<128x128xf32>
    %c0_9 = arith.constant 0 : index
    %c0_10 = arith.constant 0 : index
    %18 = vector.load %arg6[%c0_9, %c0_10] : memref<1x128xf32, #tpu.memory_space<vmem>>, vector<1x128xf32>
    %19 = vector.broadcast %18 : vector<1x128xf32> to vector<128x128xf32>
    %20 = arith.addf %17, %19 : vector<128x128xf32>
    %21 = math.tanh %20 : vector<128x128xf32>
    %22 = arith.addf %13, %21 : vector<128x128xf32>
    %23 = arith.truncf %22 : vector<128x128xf32> to vector<128x128xbf16>
    %c0_11 = arith.constant 0 : index
    %c0_12 = arith.constant 0 : index
    %24 = vector.load %arg7[%c0_11, %c0_12] : memref<128x128xbf16, #tpu.memory_space<vmem>>, vector<128x128xbf16>
    %cst_13 = arith.constant dense<0.000000e+00> : vector<128x128xf32>
    %25 = tpu.matmul %23, %24, %cst_13 {dimension_numbers = #tpu.dot_dimension_numbers<[1], [0], [0], [1], [0, 0, 1, 1], [], []>} : vector<128x128xbf16>, vector<128x128xbf16>, vector<128x128xf32> -> vector<128x128xf32>
    %c0_14 = arith.constant 0 : index
    %c0_15 = arith.constant 0 : index
    %26 = vector.load %arg8[%c0_14, %c0_15] : memref<1x128xf32, #tpu.memory_space<vmem>>, vector<1x128xf32>
    %27 = vector.broadcast %26 : vector<1x128xf32> to vector<128x128xf32>
    %28 = arith.addf %25, %27 : vector<128x128xf32>
    %c0_16 = arith.constant 0 : index
    %c0_17 = arith.constant 0 : index
    %29 = vector.load %arg1[%c0_16, %c0_17] : memref<128x128xbf16, #tpu.memory_space<vmem>>, vector<128x128xbf16>
    %30 = arith.extf %29 : vector<128x128xbf16> to vector<128x128xf32>
    %c0_18 = arith.constant 0 : index
    %c0_19 = arith.constant 0 : index
    %31 = vector.load %arg2[%c0_18, %c0_19] : memref<128x128xbf16, #tpu.memory_space<vmem>>, vector<128x128xbf16>
    %32 = arith.extf %31 : vector<128x128xbf16> to vector<128x128xf32>
    %33 = arith.subf %30, %32 : vector<128x128xf32>
    %34 = arith.subf %28, %33 : vector<128x128xf32>
    %35 = arith.mulf %34, %34 : vector<128x128xf32>
    %36 = vector.shape_cast %35 : vector<128x128xf32> to vector<16x8x128xf32>
    %cst_20 = arith.constant dense<0.000000e+00> : vector<8x128xf32>
    %37 = vector.multi_reduction <add>, %36, %cst_20 [0] : vector<16x8x128xf32> to vector<8x128xf32>
    %c0_21 = arith.constant 0 : index
    %c0_22 = arith.constant 0 : index
    %38 = vector.load %arg9[%c0_21, %c0_22] : memref<8x128xf32, #tpu.memory_space<vmem>>, vector<8x128xf32>
    tpu.vector_store %arg9[%c0_21, %c0_22], %37 {strides = array<i32>} : memref<8x128xf32, #tpu.memory_space<vmem>>, vector<8x128xf32>,
    return
  }
  func.func @transform_0(%arg0: i32) -> (i32, i32) {
    %c0_i32 = arith.constant 0 : i32
    %c0_i32_0 = arith.constant 0 : i32
    return %arg0, %c0_i32 : i32, i32
  }
  func.func @transform_1(%arg0: i32) -> (i32, i32) {
    %c0_i32 = arith.constant 0 : i32
    %c0_i32_0 = arith.constant 0 : i32
    return %arg0, %c0_i32 : i32, i32
  }
  func.func @transform_2(%arg0: i32) -> (i32, i32) {
    %c0_i32 = arith.constant 0 : i32
    %c0_i32_0 = arith.constant 0 : i32
    return %arg0, %c0_i32 : i32, i32
  }
  func.func @transform_3(%arg0: i32) -> (i32, i32) {
    %c0_i32 = arith.constant 0 : i32
    %c0_i32_0 = arith.constant 0 : i32
    return %arg0, %c0_i32 : i32, i32
  }
  func.func @transform_4(%arg0: i32) -> (i32, i32) {
    %c0_i32 = arith.constant 0 : i32
    %c0_i32_0 = arith.constant 0 : i32
    %c0_i32_1 = arith.constant 0 : i32
    return %c0_i32, %c0_i32_0 : i32, i32
  }
  func.func @transform_5(%arg0: i32) -> (i32, i32) {
    %c0_i32 = arith.constant 0 : i32
    %c0_i32_0 = arith.constant 0 : i32
    %c0_i32_1 = arith.constant 0 : i32
    return %c0_i32, %c0_i32_0 : i32, i32
  }
  func.func @transform_6(%arg0: i32) -> (i32, i32) {
    %c0_i32 = arith.constant 0 : i32
    %c0_i32_0 = arith.constant 0 : i32
    %c0_i32_1 = arith.constant 0 : i32
    return %c0_i32, %c0_i32_0 : i32, i32
  }
  func.func @transform_7(%arg0: i32) -> (i32, i32) {
    %c0_i32 = arith.constant 0 : i32
    %c0_i32_0 = arith.constant 0 : i32
    %c0_i32_1 = arith.constant 0 : i32
    return %c0_i32, %c0_i32_0 : i32, i32
  }
  func.func @transform_8(%arg0: i32) -> (i32, i32) {
    %c0_i32 = arith.constant 0 : i32
    %c0_i32_0 = arith.constant 0 : i32
    return %arg0, %c0_i32 : i32, i32
  }
}

</mosaic_0001>

<llo_original>
// kernel: tpu_custom_call.1
$region0: #{tpu_custom_call.1}
  #allocation0 [shape = 'u32[]', space=smem, size = 0x4, offset = 0x4, fixed_abs, tag = 'smem constant byte address 0x4 - core index']
  #allocation1 [shape = 'u32[72,128]{1,0:T(1,128)}', space=vmem, size = 0x9000, scoped, tag = 'internal scratch']
  %s0 = inlined_call_operand.vmem [shape: bf16[256,128], index: 0, kind: input, shape index: {}]
  %s1 = inlined_call_operand.vmem [shape: bf16[256,128], index: 1, kind: input, shape index: {}]
  %s2 = inlined_call_operand.hbm [shape: bf16[256,128], index: 2, kind: input, shape index: {}]
  %s3 = inlined_call_operand.vmem [shape: f32[256,1], index: 3, kind: input, shape index: {}]
  %s4 = inlined_call_operand.vmem [shape: f32[1,128], index: 4, kind: input, shape index: {}]
  %s5 = inlined_call_operand.vmem [shape: f32[1,128], index: 5, kind: input, shape index: {}]
  %s6 = inlined_call_operand.hbm [shape: bf16[128,128], index: 6, kind: input, shape index: {}]
  %s7 = inlined_call_operand.vmem [shape: f32[1,128], index: 7, kind: input, shape index: {}]
  %s8 = inlined_call_operand.hbm [shape: f32[16,128], index: 8, kind: output, shape index: {}]
  %s9 = sld [smem:[#allocation0]]
  $region73: #{tpu_custom_call.1} parent=0
    _
  %s11 = ssub.s32 1, %s9
  %s12 = scalar_select 0, %s11, %s9
  $region1: #{tpu_custom_call.1} parent=0
    #allocation2 [shape = 'u8[65536]{0}', space=vmem, size = 0x10000, scoped, tag = 'input window, operand 2']
    #allocation3 [shape = 's32[2]{0}', space=sflag, size = 0x8, scoped, tag = 'scoped memory for tpu_custom_call.1']
    #allocation4 [shape = 's32[2]{0}', space=sflag, size = 0x8, scoped, tag = 'scoped memory for tpu_custom_call.1']
    #allocation5 [shape = 'u8[32768]{0}', space=vmem, size = 0x8000, scoped, tag = 'input window, operand 6, single buffered']
    #allocation6 [shape = 's32[1]{0}', space=sflag, size = 0x4, scoped, tag = 'scoped memory for tpu_custom_call.1']
    #allocation7 [shape = 'u8[8192]{0}', space=vmem, size = 0x2000, scoped, tag = 'output window, operand 0']
    %13 = vsyncpa [#allocation3], 0
    %s14 = scalar_lea.sflag [#allocation3], 1
    %15 = vsyncpa %s14, 0
    %16 = vsyncpa [#allocation6], 0
    %17 = vsyncpa [#allocation4], 0
    %s18 = scalar_lea.sflag [#allocation4], 1
    %19 = vsyncpa %s18, 0
    loop: start=0, step=1, limit=4
    $region2: #{tpu_custom_call.1} parent=1 // loop_pre_header
      _
    $region3: #{tpu_custom_call.1} parent=1 // loop_header
      %s21 = sphi 0, %s25
      %p22 = scmp.ge.s32.totalorder %s21, 4
      %s31 = sphi 0, %s33
      %s34 = sphi 0, %s31
      %s35 = sphi 0, %s34
      %s51 = sphi 0, %s35
      %s57 = sphi 0, %s59
      %s60 = sphi 0, %s57
      %s61 = sphi 0, %s60
      %s77 = sphi 0, %s61
      %s83 = sphi 0, %s85
      %s86 = sphi 0, %s83
      %s87 = sphi 0, %s86
      %s103 = sphi 0, %s87
      %s109 = sphi 0, %s111
      %s112 = sphi 0, %s109
      %s113 = sphi 0, %s112
      %s129 = sphi 0, %s113
      %s133 = sphi 0, %s133
      %s135 = sphi 0, %s133
      %s136 = sphi 0, %s135
      %s150 = sphi 0, %s136
      %s154 = sphi 0, %s154
      %s156 = sphi 0, %s154
      %s157 = sphi 0, %s156
      %s171 = sphi 0, %s157
      %s175 = sphi 0, %s175
      %s177 = sphi 0, %s175
      %s178 = sphi 0, %s177
      %s192 = sphi 0, %s178
      %s196 = sphi 0, %s196
      %s198 = sphi 0, %s196
      %s199 = sphi 0, %s198
      %s213 = sphi 0, %s199
      %s219 = sphi 0, %s221
      %s222 = sphi 0, %s219
      %s223 = sphi 0, %s222
      %s239 = sphi 0, %s223
    $region4: #{tpu_custom_call.1} parent=1 // loop_header_branch
      %24 = sbr.rel (%p22) target = $region8
    $region5: #{tpu_custom_call.1} parent=1 // loop_body
      %s26 = ssub.s32 %s21, 1
      %s27 = ssub.s32 %s21, 2
      %s28 = sadd.s32 %s21, 1
      %s29 = ssub.s32 %s21, %s28
      %p30 = scmp.eq.s32.totalorder %s29, 0
      %s32 = sadd.s32 %s31, 1
      %s33 = scalar_select %p30, %s31, %s32
      %p36 = pneg %p30
      %p37 = scmp.eq.s32.totalorder %s21, 1
      %p38 = por %p36, %p37
      %p39 = scmp.ne.s32.totalorder %s31, %s34
      %p40 = scmp.eq.s32.totalorder %s21, 0
      %p41 = por %p39, %p40
      %p42 = scmp.ne.s32.totalorder %s31, %s34
      %p43 = scmp.eq.s32.totalorder %s26, 1
      %p44 = por %p42, %p43
      %p45 = scmp.ne.s32.totalorder %s34, %s35
      %p46 = scmp.eq.s32.totalorder %s26, 0
      %p47 = por %p45, %p46
      %p48 = scmp.ne.s32.totalorder %s34, %s35
      %p49 = scmp.eq.s32.totalorder %s27, 1
      %p50 = por %p48, %p49
      %p52 = scmp.ne.s32.totalorder %s35, %s51
      %p53 = scmp.eq.s32.totalorder %s27, 0
      %p54 = por %p52, %p53
      %s55 = ssub.s32 %s21, %s28
      %p56 = scmp.eq.s32.totalorder %s55, 0
      %s58 = sadd.s32 %s57, 1
      %s59 = scalar_select %p56, %s57, %s58
      %p62 = pneg %p56
      %p63 = scmp.eq.s32.totalorder %s21, 1
      %p64 = por %p62, %p63
      %p65 = scmp.ne.s32.totalorder %s57, %s60
      %p66 = scmp.eq.s32.totalorder %s21, 0
      %p67 = por %p65, %p66
      %p68 = scmp.ne.s32.totalorder %s57, %s60
      %p69 = scmp.eq.s32.totalorder %s26, 1
      %p70 = por %p68, %p69
      %p71 = scmp.ne.s32.totalorder %s60, %s61
      %p72 = scmp.eq.s32.totalorder %s26, 0
      %p73 = por %p71, %p72
      %p74 = scmp.ne.s32.totalorder %s60, %s61
      %p75 = scmp.eq.s32.totalorder %s27, 1
      %p76 = por %p74, %p75
      %p78 = scmp.ne.s32.totalorder %s61, %s77
      %p79 = scmp.eq.s32.totalorder %s27, 0
      %p80 = por %p78, %p79
      %s81 = ssub.s32 %s21, %s28
      %p82 = scmp.eq.s32.totalorder %s81, 0
      %s84 = sadd.s32 %s83, 1
      %s85 = scalar_select %p82, %s83, %s84
      %p88 = pneg %p82
      %p89 = scmp.eq.s32.totalorder %s21, 1
      %p90 = por %p88, %p89
      %p91 = scmp.ne.s32.totalorder %s83, %s86
      %p92 = scmp.eq.s32.totalorder %s21, 0
      %p93 = por %p91, %p92
      %p94 = scmp.ne.s32.totalorder %s83, %s86
      %p95 = scmp.eq.s32.totalorder %s26, 1
      %p96 = por %p94, %p95
      %p97 = scmp.ne.s32.totalorder %s86, %s87
      %p98 = scmp.eq.s32.totalorder %s26, 0
      %p99 = por %p97, %p98
      %p100 = scmp.ne.s32.totalorder %s86, %s87
      %p101 = scmp.eq.s32.totalorder %s27, 1
      %p102 = por %p100, %p101
      %p104 = scmp.ne.s32.totalorder %s87, %s103
      %p105 = scmp.eq.s32.totalorder %s27, 0
      %p106 = por %p104, %p105
      %s107 = ssub.s32 %s21, %s28
      %p108 = scmp.eq.s32.totalorder %s107, 0
      %s110 = sadd.s32 %s109, 1
      %s111 = scalar_select %p108, %s109, %s110
      %p114 = pneg %p108
      %p115 = scmp.eq.s32.totalorder %s21, 1
      %p116 = por %p114, %p115
      %p117 = scmp.ne.s32.totalorder %s109, %s112
      %p118 = scmp.eq.s32.totalorder %s21, 0
      %p119 = por %p117, %p118
      %p120 = scmp.ne.s32.totalorder %s109, %s112
      %p121 = scmp.eq.s32.totalorder %s26, 1
      %p122 = por %p120, %p121
      %p123 = scmp.ne.s32.totalorder %s112, %s113
      %p124 = scmp.eq.s32.totalorder %s26, 0
      %p125 = por %p123, %p124
      %p126 = scmp.ne.s32.totalorder %s112, %s113
      %p127 = scmp.eq.s32.totalorder %s27, 1
      %p128 = por %p126, %p127
      %p130 = scmp.ne.s32.totalorder %s113, %s129
      %p131 = scmp.eq.s32.totalorder %s27, 0
      %p132 = por %p130, %p131
      %s134 = sadd.s32 %s133, 1
      %p137 = scmp.eq.s32.totalorder %s21, 1
      %p138 = scmp.ne.s32.totalorder %s133, %s135
      %p139 = scmp.eq.s32.totalorder %s21, 0
      %p140 = por %p138, %p139
      %p141 = scmp.ne.s32.totalorder %s133, %s135
      %p142 = scmp.eq.s32.totalorder %s26, 1
      %p143 = por %p141, %p142
      %p144 = scmp.ne.s32.totalorder %s135, %s136
      %p145 = scmp.eq.s32.totalorder %s26, 0
      %p146 = por %p144, %p145
      %p147 = scmp.ne.s32.totalorder %s135, %s136
      %p148 = scmp.eq.s32.totalorder %s27, 1
      %p149 = por %p147, %p148
      %p151 = scmp.ne.s32.totalorder %s136, %s150
      %p152 = scmp.eq.s32.totalorder %s27, 0
      %p153 = por %p151, %p152
      %s155 = sadd.s32 %s154, 1
      %p158 = scmp.eq.s32.totalorder %s21, 1
      %p159 = scmp.ne.s32.totalorder %s154, %s156
      %p160 = scmp.eq.s32.totalorder %s21, 0
      %p161 = por %p159, %p160
      %p162 = scmp.ne.s32.totalorder %s154, %s156
      %p163 = scmp.eq.s32.totalorder %s26, 1
      %p164 = por %p162, %p163
      %p165 = scmp.ne.s32.totalorder %s156, %s157
      %p166 = scmp.eq.s32.totalorder %s26, 0
      %p167 = por %p165, %p166
      %p168 = scmp.ne.s32.totalorder %s156, %s157
      %p169 = scmp.eq.s32.totalorder %s27, 1
      %p170 = por %p168, %p169
      %p172 = scmp.ne.s32.totalorder %s157, %s171
      %p173 = scmp.eq.s32.totalorder %s27, 0
      %p174 = por %p172, %p173
      %s176 = sadd.s32 %s175, 1
      %p179 = scmp.eq.s32.totalorder %s21, 1
      %p180 = scmp.ne.s32.totalorder %s175, %s177
      %p181 = scmp.eq.s32.totalorder %s21, 0
      %p182 = por %p180, %p181
      %p183 = scmp.ne.s32.totalorder %s175, %s177
      %p184 = scmp.eq.s32.totalorder %s26, 1
      %p185 = por %p183, %p184
      %p186 = scmp.ne.s32.totalorder %s177, %s178
      %p187 = scmp.eq.s32.totalorder %s26, 0
      %p188 = por %p186, %p187
      %p189 = scmp.ne.s32.totalorder %s177, %s178
      %p190 = scmp.eq.s32.totalorder %s27, 1
      %p191 = por %p189, %p190
      %p193 = scmp.ne.s32.totalorder %s178, %s192
      %p194 = scmp.eq.s32.totalorder %s27, 0
      %p195 = por %p193, %p194
      %s197 = sadd.s32 %s196, 1
      %p200 = scmp.eq.s32.totalorder %s21, 1
      %p201 = scmp.ne.s32.totalorder %s196, %s198
      %p202 = scmp.eq.s32.totalorder %s21, 0
      %p203 = por %p201, %p202
      %p204 = scmp.ne.s32.totalorder %s196, %s198
      %p205 = scmp.eq.s32.totalorder %s26, 1
      %p206 = por %p204, %p205
      %p207 = scmp.ne.s32.totalorder %s198, %s199
      %p208 = scmp.eq.s32.totalorder %s26, 0
      %p209 = por %p207, %p208
      %p210 = scmp.ne.s32.totalorder %s198, %s199
      %p211 = scmp.eq.s32.totalorder %s27, 1
      %p212 = por %p210, %p211
      %p214 = scmp.ne.s32.totalorder %s199, %s213
      %p215 = scmp.eq.s32.totalorder %s27, 0
      %p216 = por %p214, %p215
      %s217 = ssub.s32 %s21, %s28
      %p218 = scmp.eq.s32.totalorder %s217, 0
      %s220 = sadd.s32 %s219, 1
      %s221 = scalar_select %p218, %s219, %s220
      %p224 = pneg %p218
      %p225 = scmp.eq.s32.totalorder %s21, 1
      %p226 = por %p224, %p225
      %p227 = scmp.ne.s32.totalorder %s219, %s222
      %p228 = scmp.eq.s32.totalorder %s21, 0
      %p229 = por %p227, %p228
      %p230 = scmp.ne.s32.totalorder %s219, %s222
      %p231 = scmp.eq.s32.totalorder %s26, 1
      %p232 = por %p230, %p231
      %p233 = scmp.ne.s32.totalorder %s222, %s223
      %p234 = scmp.eq.s32.totalorder %s26, 0
      %p235 = por %p233, %p234
      %p236 = scmp.ne.s32.totalorder %s222, %s223
      %p237 = scmp.eq.s32.totalorder %s27, 1
      %p238 = por %p236, %p237
      %p240 = scmp.ne.s32.totalorder %s223, %s239
      %p241 = scmp.eq.s32.totalorder %s27, 0
      %p242 = por %p240, %p241
      %p243 = scmp.le.s32.totalorder 1, %s21
      %p244 = scmp.lt.s32.totalorder %s21, 3
      %p245 = pnand %p243, %p244
      %p246 = pneg %p245
      // Predicated region
      $region9: #{tpu_custom_call.1} parent=5 // pred_check
        _
      $region10: #{tpu_custom_call.1} parent=5 // pred_check_branch
        %248 = sbr.rel (%p245) target = $region12
      $region11: #{tpu_custom_call.1} parent=5 // pred_region
        %s249 = ssub.s32 %s21, 1
        // Predicated region
        $region13: #{tpu_custom_call.1} parent=11 // pred_check
          %p250 = pneg %p146
        $region14: #{tpu_custom_call.1} parent=11 // pred_check_branch
          %252 = sbr.rel (%p250) target = $region16
        $region15: #{tpu_custom_call.1} parent=11 // pred_region
          _
        $region16: #{tpu_custom_call.1} parent=11 // pred_fallthru
          _
        // Predicated region
        $region17: #{tpu_custom_call.1} parent=11 // pred_check
          %p253 = pneg %p167
        $region18: #{tpu_custom_call.1} parent=11 // pred_check_branch
          %255 = sbr.rel (%p253) target = $region20
        $region19: #{tpu_custom_call.1} parent=11 // pred_region
          _
        $region20: #{tpu_custom_call.1} parent=11 // pred_fallthru
          _
        // Predicated region
        $region21: #{tpu_custom_call.1} parent=11 // pred_check
          %p256 = pneg %p188
        $region22: #{tpu_custom_call.1} parent=11 // pred_check_branch
          %258 = sbr.rel (%p256) target = $region24
        $region23: #{tpu_custom_call.1} parent=11 // pred_region
          %260 = vsyncadd [#allocation6], 0
          %s261 = sshll.u32 %s6, 4
          %s262 = int_to_ptr.hbm [resolvable:$true] %s261
          %s263 = sshll.u32 [#allocation5], 4
          %s264 = int_to_ptr.vmem [resolvable:$true] %s263
          %269 = dma.hbm_to_vmem [thread:$0]  %s262, 1024, %s264, [#allocation6], 64, 64, 4
        $region24: #{tpu_custom_call.1} parent=11 // pred_fallthru
          _
        // Predicated region
        $region25: #{tpu_custom_call.1} parent=11 // pred_check
          %p270 = pneg %p209
        $region26: #{tpu_custom_call.1} parent=11 // pred_check_branch
          %272 = sbr.rel (%p270) target = $region28
        $region27: #{tpu_custom_call.1} parent=11 // pred_region
          _
        $region28: #{tpu_custom_call.1} parent=11 // pred_fallthru
          _
      $region12: #{tpu_custom_call.1} parent=5 // pred_fallthru
        _
      %p273 = scmp.lt.s32.totalorder %s21, 2
      // Predicated region
      $region29: #{tpu_custom_call.1} parent=5 // pred_check
        %p274 = pneg %p273
      $region30: #{tpu_custom_call.1} parent=5 // pred_check_branch
        %276 = sbr.rel (%p274) target = $region32
      $region31: #{tpu_custom_call.1} parent=5 // pred_region
        // Predicated region
        $region33: #{tpu_custom_call.1} parent=31 // pred_check
          %p277 = pneg %p41
        $region34: #{tpu_custom_call.1} parent=31 // pred_check_branch
          %279 = sbr.rel (%p277) target = $region36
        $region35: #{tpu_custom_call.1} parent=31 // pred_region
          %s280 = smul.u32 16, %s21
          %p281 = scmp.lt.s32.totalorder %s280, 31
          %s282 = scalar_select %p281, %s280, 31
          %s283 = smul.addr %s282, 4
          %s284 = scalar_lea.vmem %s0, %s283
          %s285 = smul.u32 16, %s21
        $region36: #{tpu_custom_call.1} parent=31 // pred_fallthru
          _
        // Predicated region
        $region37: #{tpu_custom_call.1} parent=31 // pred_check
          %p286 = pneg %p67
        $region38: #{tpu_custom_call.1} parent=31 // pred_check_branch
          %288 = sbr.rel (%p286) target = $region40
        $region39: #{tpu_custom_call.1} parent=31 // pred_region
          %s289 = smul.u32 16, %s21
          %p290 = scmp.lt.s32.totalorder %s289, 31
          %s291 = scalar_select %p290, %s289, 31
          %s292 = smul.addr %s291, 4
          %s293 = scalar_lea.vmem %s1, %s292
          %s294 = smul.u32 16, %s21
        $region40: #{tpu_custom_call.1} parent=31 // pred_fallthru
          _
        // Predicated region
        $region41: #{tpu_custom_call.1} parent=31 // pred_check
          %p295 = pneg %p93
        $region42: #{tpu_custom_call.1} parent=31 // pred_check_branch
          %297 = sbr.rel (%p295) target = $region44
        $region43: #{tpu_custom_call.1} parent=31 // pred_region
          %s298 = sand.u32 %s83, 1
          %s299 = scalar_lea.sflag [#allocation3], %s298
          %s300 = sand.u32 %s83, 1
          %s301 = smul.addr %s300, 64
          %s302 = scalar_lea.vmem [#allocation2], %s301
          %s303 = smul.u32 16, %s21
          %305 = vsyncadd %s299, 0
          %s306 = smul.addr %s303, 4
          %s307 = scalar_lea.hbm %s2, %s306
          %s308 = sshll.u32 %s307, 4
          %s309 = int_to_ptr.hbm [resolvable:$true] %s308
          %s310 = sshll.u32 %s302, 4
          %s311 = int_to_ptr.vmem [resolvable:$true] %s310
          %316 = dma.hbm_to_vmem [thread:$0]  %s309, 1024, %s311, %s299, 64, 64, 4
        $region44: #{tpu_custom_call.1} parent=31 // pred_fallthru
          _
        // Predicated region
        $region45: #{tpu_custom_call.1} parent=31 // pred_check
          %p317 = pneg %p119
        $region46: #{tpu_custom_call.1} parent=31 // pred_check_branch
          %319 = sbr.rel (%p317) target = $region48
        $region47: #{tpu_custom_call.1} parent=31 // pred_region
          %s320 = smul.u32 16, %s21
          %p321 = scmp.lt.s32.totalorder %s320, 31
          %s322 = scalar_select %p321, %s320, 31
          %s323 = smul.addr %s322, 8
          %s324 = scalar_lea.vmem %s3, %s323
          %s325 = smul.u32 16, %s21
        $region48: #{tpu_custom_call.1} parent=31 // pred_fallthru
          _
      $region32: #{tpu_custom_call.1} parent=5 // pred_fallthru
        _
      %p326 = scmp.le.s32.totalorder 1, %s21
      %p327 = scmp.lt.s32.totalorder %s21, 3
      %p328 = pnand %p326, %p327
      %p329 = pneg %p328
      // Predicated region
      $region49: #{tpu_custom_call.1} parent=5 // pred_check
        _
      $region50: #{tpu_custom_call.1} parent=5 // pred_check_branch
        %331 = sbr.rel (%p328) target = $region52
      $region51: #{tpu_custom_call.1} parent=5 // pred_region
        %s332 = ssub.s32 %s21, 1
        %s333 = sand.u32 %s86, 1
        %s334 = scalar_lea.sflag [#allocation3], %s333
        %s335 = sand.u32 %s86, 1
        %s336 = smul.addr %s335, 64
        %s337 = scalar_lea.vmem [#allocation2], %s336
        // Predicated region
        $region53: #{tpu_custom_call.1} parent=51 // pred_check
          %p338 = pneg %p99
        $region54: #{tpu_custom_call.1} parent=51 // pred_check_branch
          %340 = sbr.rel (%p338) target = $region56
        $region55: #{tpu_custom_call.1} parent=51 // pred_region
          %342 = dma.done %s334, 1024
        $region56: #{tpu_custom_call.1} parent=51 // pred_fallthru
          _
        // Predicated region
        $region57: #{tpu_custom_call.1} parent=51 // pred_check
          %p343 = pneg %p188
        $region58: #{tpu_custom_call.1} parent=51 // pred_check_branch
          %345 = sbr.rel (%p343) target = $region60
        $region59: #{tpu_custom_call.1} parent=51 // pred_region
          %347 = dma.done [#allocation6], 1024
        $region60: #{tpu_custom_call.1} parent=51 // pred_fallthru
          _
        %s348 = smul.u32 16, %s26
        %p349 = scmp.lt.s32.totalorder %s348, 31
        %s350 = scalar_select %p349, %s348, 31
        %s351 = smul.addr %s350, 4
        %s352 = scalar_lea.vmem %s0, %s351
        %p353 = pneg %p47
        %p354 = pneg %p44
        %s355 = smul.u32 16, %s26
        %p356 = scmp.lt.s32.totalorder %s355, 31
        %s357 = scalar_select %p356, %s355, 31
        %s358 = smul.addr %s357, 4
        %s359 = scalar_lea.vmem %s1, %s358
        %p360 = pneg %p73
        %p361 = pneg %p70
        %s362 = sand.u32 %s86, 1
        %s363 = scalar_lea.sflag [#allocation3], %s362
        %s364 = sand.u32 %s86, 1
        %s365 = smul.addr %s364, 64
        %s366 = scalar_lea.vmem [#allocation2], %s365
        %p367 = pneg %p99
        %p368 = pneg %p96
        %s369 = smul.u32 16, %s26
        %p370 = scmp.lt.s32.totalorder %s369, 31
        %s371 = scalar_select %p370, %s369, 31
        %s372 = smul.addr %s371, 8
        %s373 = scalar_lea.vmem %s3, %s372
        %p374 = pneg %p125
        %p375 = pneg %p122
        %p376 = pneg %p146
        %p377 = pneg %p143
        %p378 = pneg %p167
        %p379 = pneg %p164
        %p380 = pneg %p188
        %p381 = pneg %p185
        %p382 = pneg %p209
        %p383 = pneg %p206
        %p384 = pneg %p235
        %p385 = pneg %p232
        %s386 = sand.u32 %s222, 1
        %s387 = scalar_lea.sflag [#allocation4], %s386
        %s388 = sand.u32 %s222, 1
        %s389 = smul.addr %s388, 8
        %s390 = scalar_lea.vmem [#allocation7], %s389
        %s391 = smul.u32 16, %s26
        %p392 = scmp.lt.s32.totalorder %s391, 31
        %s393 = scalar_select %p392, %s391, 31
        %s394 = smul.addr %s393, 4
        %s395 = scalar_lea.vmem %s0, %s394
        %s396 = smul.u32 16, %s26
        %s397 = smul.u32 16, %s26
        %p398 = scmp.lt.s32.totalorder %s397, 31
        %s399 = scalar_select %p398, %s397, 31
        %s400 = smul.addr %s399, 4
        %s401 = scalar_lea.vmem %s1, %s400
        %s402 = smul.u32 16, %s26
        %s403 = smul.u32 16, %s26
        %s404 = smul.u32 16, %s26
        %p405 = scmp.lt.s32.totalorder %s404, 31
        %s406 = scalar_select %p405, %s404, 31
        %s407 = smul.addr %s406, 8
        %s408 = scalar_lea.vmem %s3, %s407
        %s409 = smul.u32 16, %s26
        %v410 = vld [vmem:[%s395] sm:$0xf]
        %v411 = vld [vmem:[%s395 + $0x4] sm:$0xf]
        %v412 = vld [vmem:[%s395 + $0x8] sm:$0xf]
        %v413 = vld [vmem:[%s395 + $0xc] sm:$0xf]
        %v414 = vld [vmem:[%s395 + $0x10] sm:$0xf]
        %v415 = vld [vmem:[%s395 + $0x14] sm:$0xf]
        %v416 = vld [vmem:[%s395 + $0x18] sm:$0xf]
        %v417 = vld [vmem:[%s395 + $0x1c] sm:$0xf]
        %v418 = vld [vmem:[%s395 + $0x20] sm:$0xf]
        %v419 = vld [vmem:[%s395 + $0x24] sm:$0xf]
        %v420 = vld [vmem:[%s395 + $0x28] sm:$0xf]
        %v421 = vld [vmem:[%s395 + $0x2c] sm:$0xf]
        %v422 = vld [vmem:[%s395 + $0x30] sm:$0xf]
        %v423 = vld [vmem:[%s395 + $0x34] sm:$0xf]
        %v424 = vld [vmem:[%s395 + $0x38] sm:$0xf]
        %v425 = vld [vmem:[%s395 + $0x3c] sm:$0xf]
        %v426 = vunpack.c.l.bf16 %v410
        %v427 = vunpack.c.l.bf16 %v411
        %v428 = vunpack.c.l.bf16 %v412
        %v429 = vunpack.c.l.bf16 %v413
        %v430 = vunpack.c.l.bf16 %v414
        %v431 = vunpack.c.l.bf16 %v415
        %v432 = vunpack.c.l.bf16 %v416
        %v433 = vunpack.c.l.bf16 %v417
        %v434 = vunpack.c.l.bf16 %v418
        %v435 = vunpack.c.l.bf16 %v419
        %v436 = vunpack.c.l.bf16 %v420
        %v437 = vunpack.c.l.bf16 %v421
        %v438 = vunpack.c.l.bf16 %v422
        %v439 = vunpack.c.l.bf16 %v423
        %v440 = vunpack.c.l.bf16 %v424
        %v441 = vunpack.c.l.bf16 %v425
        %v442 = vld [vmem:[%s401] sm:$0xf]
        %v443 = vld [vmem:[%s401 + $0x4] sm:$0xf]
        %v444 = vld [vmem:[%s401 + $0x8] sm:$0xf]
        %v445 = vld [vmem:[%s401 + $0xc] sm:$0xf]
        %v446 = vld [vmem:[%s401 + $0x10] sm:$0xf]
        %v447 = vld [vmem:[%s401 + $0x14] sm:$0xf]
        %v448 = vld [vmem:[%s401 + $0x18] sm:$0xf]
        %v449 = vld [vmem:[%s401 + $0x1c] sm:$0xf]
        %v450 = vld [vmem:[%s401 + $0x20] sm:$0xf]
        %v451 = vld [vmem:[%s401 + $0x24] sm:$0xf]
        %v452 = vld [vmem:[%s401 + $0x28] sm:$0xf]
        %v453 = vld [vmem:[%s401 + $0x2c] sm:$0xf]
        %v454 = vld [vmem:[%s401 + $0x30] sm:$0xf]
        %v455 = vld [vmem:[%s401 + $0x34] sm:$0xf]
        %v456 = vld [vmem:[%s401 + $0x38] sm:$0xf]
        %v457 = vld [vmem:[%s401 + $0x3c] sm:$0xf]
        %v458 = vunpack.c.l.bf16 %v442
        %v459 = vunpack.c.l.bf16 %v443
        %v460 = vunpack.c.l.bf16 %v444
        %v461 = vunpack.c.l.bf16 %v445
        %v462 = vunpack.c.l.bf16 %v446
        %v463 = vunpack.c.l.bf16 %v447
        %v464 = vunpack.c.l.bf16 %v448
        %v465 = vunpack.c.l.bf16 %v449
        %v466 = vunpack.c.l.bf16 %v450
        %v467 = vunpack.c.l.bf16 %v451
        %v468 = vunpack.c.l.bf16 %v452
        %v469 = vunpack.c.l.bf16 %v453
        %v470 = vunpack.c.l.bf16 %v454
        %v471 = vunpack.c.l.bf16 %v455
        %v472 = vunpack.c.l.bf16 %v456
        %v473 = vunpack.c.l.bf16 %v457
        %v474 = vld [vmem:[%s337] sm:$0xf]
        %v475 = vld [vmem:[%s337 + $0x4] sm:$0xf]
        %v476 = vld [vmem:[%s337 + $0x8] sm:$0xf]
        %v477 = vld [vmem:[%s337 + $0xc] sm:$0xf]
        %v478 = vld [vmem:[%s337 + $0x10] sm:$0xf]
        %v479 = vld [vmem:[%s337 + $0x14] sm:$0xf]
        %v480 = vld [vmem:[%s337 + $0x18] sm:$0xf]
        %v481 = vld [vmem:[%s337 + $0x1c] sm:$0xf]
        %v482 = vld [vmem:[%s337 + $0x20] sm:$0xf]
        %v483 = vld [vmem:[%s337 + $0x24] sm:$0xf]
        %v484 = vld [vmem:[%s337 + $0x28] sm:$0xf]
        %v485 = vld [vmem:[%s337 + $0x2c] sm:$0xf]
        %v486 = vld [vmem:[%s337 + $0x30] sm:$0xf]
        %v487 = vld [vmem:[%s337 + $0x34] sm:$0xf]
        %v488 = vld [vmem:[%s337 + $0x38] sm:$0xf]
        %v489 = vld [vmem:[%s337 + $0x3c] sm:$0xf]
        %v490 = vunpack.c.l.bf16 %v474
        %v491 = vunpack.c.l.bf16 %v475
        %v492 = vunpack.c.l.bf16 %v476
        %v493 = vunpack.c.l.bf16 %v477
        %v494 = vunpack.c.l.bf16 %v478
        %v495 = vunpack.c.l.bf16 %v479
        %v496 = vunpack.c.l.bf16 %v480
        %v497 = vunpack.c.l.bf16 %v481
        %v498 = vunpack.c.l.bf16 %v482
        %v499 = vunpack.c.l.bf16 %v483
        %v500 = vunpack.c.l.bf16 %v484
        %v501 = vunpack.c.l.bf16 %v485
        %v502 = vunpack.c.l.bf16 %v486
        %v503 = vunpack.c.l.bf16 %v487
        %v504 = vunpack.c.l.bf16 %v488
        %v505 = vunpack.c.l.bf16 %v489
        %v506 = vld [vmem:[%s408] sm:$0xff]
        %v507 = vld [vmem:[%s408 + $0x8] sm:$0xff]
        %v508 = vld [vmem:[%s408 + $0x10] sm:$0xff]
        %v509 = vld [vmem:[%s408 + $0x18] sm:$0xff]
        %v510 = vld [vmem:[%s408 + $0x20] sm:$0xff]
        %v511 = vld [vmem:[%s408 + $0x28] sm:$0xff]
        %v512 = vld [vmem:[%s408 + $0x30] sm:$0xff]
        %v513 = vld [vmem:[%s408 + $0x38] sm:$0xff]
        %v514 = vld [vmem:[%s408 + $0x40] sm:$0xff]
        %v515 = vld [vmem:[%s408 + $0x48] sm:$0xff]
        %v516 = vld [vmem:[%s408 + $0x50] sm:$0xff]
        %v517 = vld [vmem:[%s408 + $0x58] sm:$0xff]
        %v518 = vld [vmem:[%s408 + $0x60] sm:$0xff]
        %v519 = vld [vmem:[%s408 + $0x68] sm:$0xff]
        %v520 = vld [vmem:[%s408 + $0x70] sm:$0xff]
        %v521 = vld [vmem:[%s408 + $0x78] sm:$0xff]
        %v522 = vsub.f32 %v426, %v458
        %v523 = vsub.f32 %v427, %v459
        %v524 = vsub.f32 %v428, %v460
        %v525 = vsub.f32 %v429, %v461
        %v526 = vsub.f32 %v430, %v462
        %v527 = vsub.f32 %v431, %v463
        %v528 = vsub.f32 %v432, %v464
        %v529 = vsub.f32 %v433, %v465
        %v530 = vsub.f32 %v434, %v466
        %v531 = vsub.f32 %v435, %v467
        %v532 = vsub.f32 %v436, %v468
        %v533 = vsub.f32 %v437, %v469
        %v534 = vsub.f32 %v438, %v470
        %v535 = vsub.f32 %v439, %v471
        %v536 = vsub.f32 %v440, %v472
        %v537 = vsub.f32 %v441, %v473
        %539 = vset.pattern.permute.xlu0 0
        %540 = vperm.xlu0 %539, %v506
        %v541 = vpop.permute.xlu0 %540
        %544 = vset.pattern.permute.xlu0 0
        %545 = vperm.xlu0 %544, %v507
        %v546 = vpop.permute.xlu0 %545
        %549 = vset.pattern.permute.xlu0 0
        %550 = vperm.xlu0 %549, %v508
        %v551 = vpop.permute.xlu0 %550
        %554 = vset.pattern.permute.xlu0 0
        %555 = vperm.xlu0 %554, %v509
        %v556 = vpop.permute.xlu0 %555
        %559 = vset.pattern.permute.xlu0 0
        %560 = vperm.xlu0 %559, %v510
        %v561 = vpop.permute.xlu0 %560
        %564 = vset.pattern.permute.xlu0 0
        %565 = vperm.xlu0 %564, %v511
        %v566 = vpop.permute.xlu0 %565
        %569 = vset.pattern.permute.xlu0 0
        %570 = vperm.xlu0 %569, %v512
        %v571 = vpop.permute.xlu0 %570
        %574 = vset.pattern.permute.xlu0 0
        %575 = vperm.xlu0 %574, %v513
        %v576 = vpop.permute.xlu0 %575
        %579 = vset.pattern.permute.xlu0 0
        %580 = vperm.xlu0 %579, %v514
        %v581 = vpop.permute.xlu0 %580
        %584 = vset.pattern.permute.xlu0 0
        %585 = vperm.xlu0 %584, %v515
        %v586 = vpop.permute.xlu0 %585
        %589 = vset.pattern.permute.xlu0 0
        %590 = vperm.xlu0 %589, %v516
        %v591 = vpop.permute.xlu0 %590
        %594 = vset.pattern.permute.xlu0 0
        %595 = vperm.xlu0 %594, %v517
        %v596 = vpop.permute.xlu0 %595
        %599 = vset.pattern.permute.xlu0 0
        %600 = vperm.xlu0 %599, %v518
        %v601 = vpop.permute.xlu0 %600
        %604 = vset.pattern.permute.xlu0 0
        %605 = vperm.xlu0 %604, %v519
        %v606 = vpop.permute.xlu0 %605
        %609 = vset.pattern.permute.xlu0 0
        %610 = vperm.xlu0 %609, %v520
        %v611 = vpop.permute.xlu0 %610
        %614 = vset.pattern.permute.xlu0 0
        %615 = vperm.xlu0 %614, %v521
        %v616 = vpop.permute.xlu0 %615
        %v618 = vmul.f32 %v541, %v522
        %v619 = vmul.f32 %v546, %v523
        %v620 = vmul.f32 %v551, %v524
        %v621 = vmul.f32 %v556, %v525
        %v622 = vmul.f32 %v561, %v526
        %v623 = vmul.f32 %v566, %v527
        %v624 = vmul.f32 %v571, %v528
        %v625 = vmul.f32 %v576, %v529
        %v626 = vmul.f32 %v581, %v530
        %v627 = vmul.f32 %v586, %v531
        %v628 = vmul.f32 %v591, %v532
        %v629 = vmul.f32 %v596, %v533
        %v630 = vmul.f32 %v601, %v534
        %v631 = vmul.f32 %v606, %v535
        %v632 = vmul.f32 %v611, %v536
        %v633 = vmul.f32 %v616, %v537
        %v634 = vadd.f32 %v458, %v618
        %v635 = vadd.f32 %v459, %v619
        %v636 = vadd.f32 %v460, %v620
        %v637 = vadd.f32 %v461, %v621
        %v638 = vadd.f32 %v462, %v622
        %v639 = vadd.f32 %v463, %v623
        %v640 = vadd.f32 %v464, %v624
        %v641 = vadd.f32 %v465, %v625
        %v642 = vadd.f32 %v466, %v626
        %v643 = vadd.f32 %v467, %v627
        %v644 = vadd.f32 %v468, %v628
        %v645 = vadd.f32 %v469, %v629
        %v646 = vadd.f32 %v470, %v630
        %v647 = vadd.f32 %v471, %v631
        %v648 = vadd.f32 %v472, %v632
        %v649 = vadd.f32 %v473, %v633
        %v650 = vmul.f32 %v490, 0.1
        %v651 = vmul.f32 %v491, 0.1
        %v652 = vmul.f32 %v492, 0.1
        %v653 = vmul.f32 %v493, 0.1
        %v654 = vmul.f32 %v494, 0.1
        %v655 = vmul.f32 %v495, 0.1
        %v656 = vmul.f32 %v496, 0.1
        %v657 = vmul.f32 %v497, 0.1
        %v658 = vmul.f32 %v498, 0.1
        %v659 = vmul.f32 %v499, 0.1
        %v660 = vmul.f32 %v500, 0.1
        %v661 = vmul.f32 %v501, 0.1
        %v662 = vmul.f32 %v502, 0.1
        %v663 = vmul.f32 %v503, 0.1
        %v664 = vmul.f32 %v504, 0.1
        %v665 = vmul.f32 %v505, 0.1
        %v666 = vadd.f32 %v634, %v650
        %v667 = vadd.f32 %v635, %v651
        %v668 = vadd.f32 %v636, %v652
        %v669 = vadd.f32 %v637, %v653
        %v670 = vadd.f32 %v638, %v654
        %v671 = vadd.f32 %v639, %v655
        %v672 = vadd.f32 %v640, %v656
        %v673 = vadd.f32 %v641, %v657
        %v674 = vadd.f32 %v642, %v658
        %v675 = vadd.f32 %v643, %v659
        %v676 = vadd.f32 %v644, %v660
        %v677 = vadd.f32 %v645, %v661
        %v678 = vadd.f32 %v646, %v662
        %v679 = vadd.f32 %v647, %v663
        %v680 = vadd.f32 %v648, %v664
        %v681 = vadd.f32 %v649, %v665
        %v682 = vld [vmem:[%s4] sm:$0x1]
        %v684 = vperm.slane %v682, 0
        %v686 = vmul.f32 %v541, %v684
        %v687 = vmul.f32 %v546, %v684
        %v688 = vmul.f32 %v551, %v684
        %v689 = vmul.f32 %v556, %v684
        %v690 = vmul.f32 %v561, %v684
        %v691 = vmul.f32 %v566, %v684
        %v692 = vmul.f32 %v571, %v684
        %v693 = vmul.f32 %v576, %v684
        %v694 = vmul.f32 %v581, %v684
        %v695 = vmul.f32 %v586, %v684
        %v696 = vmul.f32 %v591, %v684
        %v697 = vmul.f32 %v596, %v684
        %v698 = vmul.f32 %v601, %v684
        %v699 = vmul.f32 %v606, %v684
        %v700 = vmul.f32 %v611, %v684
        %v701 = vmul.f32 %v616, %v684
        %v702 = vld [vmem:[%s5] sm:$0x1]
        %v704 = vperm.slane %v702, 0
        %v706 = vadd.f32 %v686, %v704
        %v707 = vadd.f32 %v687, %v704
        %v708 = vadd.f32 %v688, %v704
        %v709 = vadd.f32 %v689, %v704
        %v710 = vadd.f32 %v690, %v704
        %v711 = vadd.f32 %v691, %v704
        %v712 = vadd.f32 %v692, %v704
        %v713 = vadd.f32 %v693, %v704
        %v714 = vadd.f32 %v694, %v704
        %v715 = vadd.f32 %v695, %v704
        %v716 = vadd.f32 %v696, %v704
        %v717 = vadd.f32 %v697, %v704
        %v718 = vadd.f32 %v698, %v704
        %v719 = vadd.f32 %v699, %v704
        %v720 = vadd.f32 %v700, %v704
        %v721 = vadd.f32 %v701, %v704
        %v722 = vtanh.pop %v706
        %v723 = vtanh.pop %v707
        %v724 = vtanh.pop %v708
        %v725 = vtanh.pop %v709
        %v726 = vtanh.pop %v710
        %v727 = vtanh.pop %v711
        %v728 = vtanh.pop %v712
        %v729 = vtanh.pop %v713
        %v730 = vtanh.pop %v714
        %v731 = vtanh.pop %v715
        %v732 = vtanh.pop %v716
        %v733 = vtanh.pop %v717
        %v734 = vtanh.pop %v718
        %v735 = vtanh.pop %v719
        %v736 = vtanh.pop %v720
        %v737 = vtanh.pop %v721
        %v738 = vadd.f32 %v666, %v722
        %v739 = vadd.f32 %v667, %v723
        %v740 = vadd.f32 %v668, %v724
        %v741 = vadd.f32 %v669, %v725
        %v742 = vadd.f32 %v670, %v726
        %v743 = vadd.f32 %v671, %v727
        %v744 = vadd.f32 %v672, %v728
        %v745 = vadd.f32 %v673, %v729
        %v746 = vadd.f32 %v674, %v730
        %v747 = vadd.f32 %v675, %v731
        %v748 = vadd.f32 %v676, %v732
        %v749 = vadd.f32 %v677, %v733
        %v750 = vadd.f32 %v678, %v734
        %v751 = vadd.f32 %v679, %v735
        %v752 = vadd.f32 %v680, %v736
        %v753 = vadd.f32 %v681, %v737
        %v754 = vpack.c.bf16 %v739, %v738
        %v755 = vpack.c.bf16 %v741, %v740
        %v756 = vpack.c.bf16 %v743, %v742
        %v757 = vpack.c.bf16 %v745, %v744
        %v758 = vpack.c.bf16 %v747, %v746
        %v759 = vpack.c.bf16 %v749, %v748
        %v760 = vpack.c.bf16 %v751, %v750
        %v761 = vpack.c.bf16 %v753, %v752
        %v762 = vld [vmem:[#allocation5] sm:$0xf]
        %v763 = vld [vmem:[#allocation5 + $0x4] sm:$0xf]
        %v764 = vld [vmem:[#allocation5 + $0x8] sm:$0xf]
        %v765 = vld [vmem:[#allocation5 + $0xc] sm:$0xf]
        %v766 = vld [vmem:[#allocation5 + $0x10] sm:$0xf]
        %v767 = vld [vmem:[#allocation5 + $0x14] sm:$0xf]
        %v768 = vld [vmem:[#allocation5 + $0x18] sm:$0xf]
        %v769 = vld [vmem:[#allocation5 + $0x1c] sm:$0xf]
        %v770 = vld [vmem:[#allocation5 + $0x20] sm:$0xf]
        %v771 = vld [vmem:[#allocation5 + $0x24] sm:$0xf]
        %v772 = vld [vmem:[#allocation5 + $0x28] sm:$0xf]
        %v773 = vld [vmem:[#allocation5 + $0x2c] sm:$0xf]
        %v774 = vld [vmem:[#allocation5 + $0x30] sm:$0xf]
        %v775 = vld [vmem:[#allocation5 + $0x34] sm:$0xf]
        %v776 = vld [vmem:[#allocation5 + $0x38] sm:$0xf]
        %v777 = vld [vmem:[#allocation5 + $0x3c] sm:$0xf]
        %v778 = vld [vmem:[%s7] sm:$0x1]
        %v780 = vperm.slane %v778, 0
        %v798 = vunpack.c.l.b16 %v762
        %v799 = vunpack.c.l.b16 %v763
        %v800 = vunpack.c.l.b16 %v764
        %v801 = vunpack.c.l.b16 %v765
        %v802 = vunpack.c.l.b16 %v766
        %v803 = vunpack.c.l.b16 %v767
        %v804 = vunpack.c.l.b16 %v768
        %v805 = vunpack.c.l.b16 %v769
        %v806 = vunpack.c.l.b16 %v770
        %v807 = vunpack.c.l.b16 %v771
        %v808 = vunpack.c.l.b16 %v772
        %v809 = vunpack.c.l.b16 %v773
        %v810 = vunpack.c.l.b16 %v774
        %v811 = vunpack.c.l.b16 %v775
        %v812 = vunpack.c.l.b16 %v776
        %v813 = vunpack.c.l.b16 %v777
        %v814 = vpack.c.b16 %v799, %v798
        %v815 = vpack.c.b16 %v801, %v800
        %v816 = vpack.c.b16 %v803, %v802
        %v817 = vpack.c.b16 %v805, %v804
        %v818 = vpack.c.b16 %v807, %v806
        %v819 = vpack.c.b16 %v809, %v808
        %v820 = vpack.c.b16 %v811, %v810
        %v821 = vpack.c.b16 %v813, %v812
        %830 = vmatpush.bf16.msra.mxu0 %v821
        %831 = vmatpush.bf16.msra.mxu0 %v820
        %832 = vmatpush.bf16.msra.mxu0 %v819
        %833 = vmatpush.bf16.msra.mxu0 %v818
        %834 = vmatpush.bf16.msra.mxu0 %v817
        %835 = vmatpush.bf16.msra.mxu0 %v816
        %836 = vmatpush.bf16.msra.mxu0 %v815
        %837 = vmatpush.bf16.msra.mxu0 %v814
        %838 = vmatmul.bf16.gmra.mxu0 %v754
        %v839 = vpop.f32.mrf.mxu0
        %v840 = vadd.f32 %v780, %v839
        %v841 = vpop.f32.mrf.mxu0
        %v842 = vadd.f32 %v780, %v841
        %843 = vmatmul.bf16.gmra.mxu0 %v755
        %v844 = vpop.f32.mrf.mxu0
        %v845 = vadd.f32 %v780, %v844
        %v846 = vpop.f32.mrf.mxu0
        %v847 = vadd.f32 %v780, %v846
        %848 = vmatmul.bf16.gmra.mxu0 %v756
        %v849 = vpop.f32.mrf.mxu0
        %v850 = vadd.f32 %v780, %v849
        %v851 = vpop.f32.mrf.mxu0
        %v852 = vadd.f32 %v780, %v851
        %853 = vmatmul.bf16.gmra.mxu0 %v757
        %v854 = vpop.f32.mrf.mxu0
        %v855 = vadd.f32 %v780, %v854
        %v856 = vpop.f32.mrf.mxu0
        %v857 = vadd.f32 %v780, %v856
        %858 = vmatmul.bf16.gmra.mxu0 %v758
        %v859 = vpop.f32.mrf.mxu0
        %v860 = vadd.f32 %v780, %v859
        %v861 = vpop.f32.mrf.mxu0
        %v862 = vadd.f32 %v780, %v861
        %863 = vmatmul.bf16.gmra.mxu0 %v759
        %v864 = vpop.f32.mrf.mxu0
        %v865 = vadd.f32 %v780, %v864
        %v866 = vpop.f32.mrf.mxu0
        %v867 = vadd.f32 %v780, %v866
        %868 = vmatmul.bf16.gmra.mxu0 %v760
        %v869 = vpop.f32.mrf.mxu0
        %v870 = vadd.f32 %v780, %v869
        %v871 = vpop.f32.mrf.mxu0
        %v872 = vadd.f32 %v780, %v871
        %873 = vmatmul.bf16.gmra.mxu0 %v761
        %v874 = vpop.f32.mrf.mxu0
        %v875 = vadd.f32 %v780, %v874
        %v876 = vpop.f32.mrf.mxu0
        %v877 = vadd.f32 %v780, %v876
        %878 = vdwg.mxu0
        %v879 = vsub.f32 %v840, %v522
        %v880 = vsub.f32 %v842, %v523
        %v881 = vsub.f32 %v845, %v524
        %v882 = vsub.f32 %v847, %v525
        %v883 = vsub.f32 %v850, %v526
        %v884 = vsub.f32 %v852, %v527
        %v885 = vsub.f32 %v855, %v528
        %v886 = vsub.f32 %v857, %v529
        %v887 = vsub.f32 %v860, %v530
        %v888 = vsub.f32 %v862, %v531
        %v889 = vsub.f32 %v865, %v532
        %v890 = vsub.f32 %v867, %v533
        %v891 = vsub.f32 %v870, %v534
        %v892 = vsub.f32 %v872, %v535
        %v893 = vsub.f32 %v875, %v536
        %v894 = vsub.f32 %v877, %v537
        %v895 = vmul.f32 %v879, %v879
        %v896 = vmul.f32 %v880, %v880
        %v897 = vmul.f32 %v881, %v881
        %v898 = vmul.f32 %v882, %v882
        %v899 = vmul.f32 %v883, %v883
        %v900 = vmul.f32 %v884, %v884
        %v901 = vmul.f32 %v885, %v885
        %v902 = vmul.f32 %v886, %v886
        %v903 = vmul.f32 %v887, %v887
        %v904 = vmul.f32 %v888, %v888
        %v905 = vmul.f32 %v889, %v889
        %v906 = vmul.f32 %v890, %v890
        %v907 = vmul.f32 %v891, %v891
        %v908 = vmul.f32 %v892, %v892
        %v909 = vmul.f32 %v893, %v893
        %v910 = vmul.f32 %v894, %v894
        %v911 = vadd.f32 %v895, %v896
        %v912 = vadd.f32 %v911, %v897
        %v913 = vadd.f32 %v912, %v898
        %v914 = vadd.f32 %v913, %v899
        %v915 = vadd.f32 %v914, %v900
        %v916 = vadd.f32 %v915, %v901
        %v917 = vadd.f32 %v916, %v902
        %v918 = vadd.f32 %v917, %v903
        %v919 = vadd.f32 %v918, %v904
        %v920 = vadd.f32 %v919, %v905
        %v921 = vadd.f32 %v920, %v906
        %v922 = vadd.f32 %v921, %v907
        %v923 = vadd.f32 %v922, %v908
        %v924 = vadd.f32 %v923, %v909
        %v925 = vadd.f32 %v924, %v910
        %926 = vst [vmem:[%s390] sm:$0xff] %v925
        %s927 = sand.u32 %s222, 1
        %s928 = scalar_lea.sflag [#allocation4], %s927
        %s929 = sand.u32 %s222, 1
        %s930 = smul.addr %s929, 8
        %s931 = scalar_lea.vmem [#allocation7], %s930
        // Predicated region
        $region61: #{tpu_custom_call.1} parent=51 // pred_check
          %p932 = pneg %p232
        $region62: #{tpu_custom_call.1} parent=51 // pred_check_branch
          %934 = sbr.rel (%p932) target = $region64
        $region63: #{tpu_custom_call.1} parent=51 // pred_region
          %936 = vsyncadd %s928, 0
          %s937 = smul.addr %s26, 8
          %s938 = scalar_lea.hbm %s8, %s937
          %s940 = sshll.u32 %s931, 4
          %s941 = int_to_ptr.vmem [resolvable:$true] %s940
          %s942 = sshll.u32 %s938, 4
          %s943 = int_to_ptr.hbm [resolvable:$true] %s942
          %945 = dma.vmem_to_hbm [thread:$0]  %s941, 128, %s943, %s928
        $region64: #{tpu_custom_call.1} parent=51 // pred_fallthru
          _
      $region52: #{tpu_custom_call.1} parent=5 // pred_fallthru
        _
      %p946 = scmp.le.s32.totalorder 2, %s21
      // Predicated region
      $region65: #{tpu_custom_call.1} parent=5 // pred_check
        %p947 = pneg %p946
      $region66: #{tpu_custom_call.1} parent=5 // pred_check_branch
        %949 = sbr.rel (%p947) target = $region68
      $region67: #{tpu_custom_call.1} parent=5 // pred_region
        %s950 = ssub.s32 %s21, 2
        // Predicated region
        $region69: #{tpu_custom_call.1} parent=67 // pred_check
          %p951 = pneg %p238
        $region70: #{tpu_custom_call.1} parent=67 // pred_check_branch
          %953 = sbr.rel (%p951) target = $region72
        $region71: #{tpu_custom_call.1} parent=67 // pred_region
          %s954 = sand.u32 %s223, 1
          %s955 = scalar_lea.sflag [#allocation4], %s954
          %s956 = sand.u32 %s223, 1
          %s957 = smul.addr %s956, 8
          %s958 = scalar_lea.vmem [#allocation7], %s957
          %960 = dma.done %s955, 128
        $region72: #{tpu_custom_call.1} parent=67 // pred_fallthru
          _
      $region68: #{tpu_custom_call.1} parent=5 // pred_fallthru
        _
    $region6: #{tpu_custom_call.1} parent=1 // loop_footer
      %s25 = sadd.s32 1, %s21
    $region7: #{tpu_custom_call.1} parent=1 // loop_footer_branch
      %20 = sbr.rel target = $region3
    $region8: #{tpu_custom_call.1} parent=1 // loop_exit
      _
    %961 = vsyncpa [#allocation3], 1
    %s962 = scalar_lea.sflag [#allocation3], 1
    %963 = vsyncpa %s962, 1
    %964 = vsyncpa [#allocation6], 1
    %965 = vsyncpa [#allocation4], 1
    %s966 = scalar_lea.sflag [#allocation4], 1
    %967 = vsyncpa %s966, 1

</llo_original>
